<compile_context>
chip_gen: v7x
topology: tpu7x:2x2x1
jax: 0.10.0
libtpu: 0.0.40
codegen_flags: <defaults>
</compile_context>

<pallas_src>
import functools

import jax
import jax.numpy as jnp
from jax.experimental import pallas as pl
from jax.experimental.pallas import tpu as pltpu

_VMEM_LIMIT = 32 * 1024 * 1024          # fits v7x (64 MiB/TC) with headroom
_NEG = float(jnp.finfo(jnp.bfloat16).min)


def _round_up(x, m):
    return (x + m - 1) // m * m


# ----------------------------------------------------------------------------
# Kernel 1: tiled matmul with fused BN affine (+ optional residual, ReLU)
# ----------------------------------------------------------------------------
def _mm_bn_kernel(x_ref, w_ref, s_ref, b_ref, *rest, relu, has_res):
    if has_res:
        r_ref, o_ref, acc_ref = rest
    else:
        o_ref, acc_ref = rest

    @pl.when(pl.program_id(2) == 0)
    def _init():
        acc_ref[...] = jnp.zeros_like(acc_ref)

    acc_ref[...] += jnp.dot(x_ref[...], w_ref[...],
                            preferred_element_type=jnp.float32)

    @pl.when(pl.program_id(2) == pl.num_programs(2) - 1)
    def _epilogue():
        y = acc_ref[...] * s_ref[...] + b_ref[...]
        if has_res:
            y = y + r_ref[...].astype(jnp.float32)
        if relu:
            y = jnp.maximum(y, 0.0)
        o_ref[...] = y.astype(o_ref.dtype)


@functools.partial(jax.jit, static_argnames=("relu",))
def matmul_bn_act(x, w, scale, shift, residual=None, *, relu=False):
    """(x @ w) * scale + shift [+ residual] [ReLU]; bf16 I/O, f32 accumulate."""
    M, K = x.shape
    N = w.shape[1]
    tm = 256 if M > 256 else _round_up(M, 8)
    tn = 256 if N > 256 else _round_up(N, 128)
    tk = 512 if K > 512 else _round_up(K, 128)
    Mp, Np, Kp = _round_up(M, tm), _round_up(N, tn), _round_up(K, tk)

    xq = jnp.pad(x.astype(jnp.bfloat16), ((0, Mp - M), (0, Kp - K)))
    wq = jnp.pad(w.astype(jnp.bfloat16), ((0, Kp - K), (0, Np - N)))
    sq = jnp.pad(scale.astype(jnp.float32).reshape(1, N), ((0, 0), (0, Np - N)))
    bq = jnp.pad(shift.astype(jnp.float32).reshape(1, N), ((0, 0), (0, Np - N)))

    has_res = residual is not None
    in_specs = [
        pl.BlockSpec((tm, tk), lambda i, j, k: (i, k)),
        pl.BlockSpec((tk, tn), lambda i, j, k: (k, j)),
        pl.BlockSpec((1, tn), lambda i, j, k: (0, j)),
        pl.BlockSpec((1, tn), lambda i, j, k: (0, j)),
    ]
    args = [xq, wq, sq, bq]
    if has_res:
        rq = jnp.pad(residual.astype(jnp.bfloat16), ((0, Mp - M), (0, Np - N)))
        in_specs.append(pl.BlockSpec((tm, tn), lambda i, j, k: (i, j)))
        args.append(rq)

    out = pl.pallas_call(
        functools.partial(_mm_bn_kernel, relu=relu, has_res=has_res),
        out_shape=jax.ShapeDtypeStruct((Mp, Np), jnp.bfloat16),
        grid=(Mp // tm, Np // tn, Kp // tk),
        in_specs=in_specs,
        out_specs=pl.BlockSpec((tm, tn), lambda i, j, k: (i, j)),
        scratch_shapes=[pltpu.VMEM((tm, tn), jnp.float32)],
        compiler_params=pltpu.CompilerParams(
            dimension_semantics=("parallel", "parallel", "arbitrary"),
            vmem_limit_bytes=_VMEM_LIMIT),
    )(*args)
    return out[:M, :N]


# ----------------------------------------------------------------------------
# Kernel 2: direct stride-1 KxK conv (padded image resident in VMEM;
#           kh*kw shifted matmuls in-kernel -> no im2col HBM traffic)
# ----------------------------------------------------------------------------
def _conv_direct_kernel(x_ref, w_ref, s_ref, b_ref, o_ref, *, kh, kw, wp, ho, relu):
    span = ho * wp
    cout = o_ref.shape[-1]
    acc = jnp.zeros((span, cout), jnp.float32)
    for i in range(kh):
        for j in range(kw):
            off = i * wp + j                          # static offset
            patch = x_ref[0, pl.ds(off, span), :]     # [span, Cin] bf16
            acc = acc + jnp.dot(patch, w_ref[i * kw + j],
                                preferred_element_type=jnp.float32)
    y = acc * s_ref[...] + b_ref[...]
    if relu:
        y = jnp.maximum(y, 0.0)
    o_ref[0] = y.astype(o_ref.dtype)


@functools.partial(jax.jit, static_argnames=("kh", "kw", "wp", "ho", "relu"))
def conv2d_direct(xflat, w_taps, scale, shift, *, kh, kw, wp, ho, relu):
    # TODO(synk): at very large spatial sizes the per-image accumulator should
    #             additionally be tiled over output rows; fine at these scales.
    n, lp, cin = xflat.shape
    cout = w_taps.shape[-1]
    return pl.pallas_call(
        functools.partial(_conv_direct_kernel, kh=kh, kw=kw, wp=wp, ho=ho, relu=relu),
        out_shape=jax.ShapeDtypeStruct((n, ho * wp, cout), jnp.bfloat16),
        grid=(n,),
        in_specs=[
            pl.BlockSpec((1, lp, cin), lambda b: (b, 0, 0)),
            pl.BlockSpec((kh * kw, cin, cout), lambda b: (0, 0, 0)),
            pl.BlockSpec((1, cout), lambda b: (0, 0)),
            pl.BlockSpec((1, cout), lambda b: (0, 0)),
        ],
        out_specs=pl.BlockSpec((1, ho * wp, cout), lambda b: (b, 0, 0)),
        compiler_params=pltpu.CompilerParams(
            dimension_semantics=("parallel",), vmem_limit_bytes=_VMEM_LIMIT),
    )(xflat, w_taps, scale.reshape(1, cout), shift.reshape(1, cout))


# ----------------------------------------------------------------------------
# Kernel 3: stride-1 3x3 running max on the padded slab (maxpool core)
# ----------------------------------------------------------------------------
def _maxpool_kernel(x_ref, o_ref, *, wp, hof):
    span = hof * wp
    m = x_ref[0, pl.ds(0, span), :]
    for i in range(3):
        for j in range(3):
            if i == 0 and j == 0:
                continue
            m = jnp.maximum(m, x_ref[0, pl.ds(i * wp + j, span), :])
    o_ref[0] = m.astype(o_ref.dtype)


@functools.partial(jax.jit, static_argnames=("wp", "hof"))
def maxpool_flat(xflat, *, wp, hof):
    n, lp, c = xflat.shape
    return pl.pallas_call(
        functools.partial(_maxpool_kernel, wp=wp, hof=hof),
        out_shape=jax.ShapeDtypeStruct((n, hof * wp, c), jnp.bfloat16),
        grid=(n,),
        in_specs=[pl.BlockSpec((1, lp, c), lambda b: (b, 0, 0))],
        out_specs=pl.BlockSpec((1, hof * wp, c), lambda b: (b, 0, 0)),
        compiler_params=pltpu.CompilerParams(
            dimension_semantics=("parallel",), vmem_limit_bytes=_VMEM_LIMIT),
    )(xflat)


# ----------------------------------------------------------------------------
# Kernel 4: global average pool
# ----------------------------------------------------------------------------
def _avgpool_kernel(x_ref, o_ref):
    x = x_ref[0].astype(jnp.float32)                   # [HW, C]
    hw = x.shape[0]
    o_ref[0] = (jnp.sum(x, axis=0, keepdims=True) * (1.0 / hw)).astype(o_ref.dtype)


@jax.jit
def global_avg_pool(x):                                # x: [N, HW, C]
    n, hw, c = x.shape
    out = pl.pallas_call(
        _avgpool_kernel,
        out_shape=jax.ShapeDtypeStruct((n, 1, c), jnp.bfloat16),
        grid=(n,),
        in_specs=[pl.BlockSpec((1, hw, c), lambda b: (b, 0, 0))],
        out_specs=pl.BlockSpec((1, 1, c), lambda b: (b, 0, 0)),
        compiler_params=pltpu.CompilerParams(
            dimension_semantics=("parallel",), vmem_limit_bytes=_VMEM_LIMIT),
    )(x)
    return out[:, 0, :]


# ----------------------------------------------------------------------------
# Plain-JAX glue
# ----------------------------------------------------------------------------
def _pad_flatten(x, pad, fill=0.0):
    """NHWC -> [N, (H+2p)*(W+2p)+(W+2p), C]: spatial pad, flatten, +1 guard row."""
    n, h, w, c = x.shape
    hp, wp = h + 2 * pad, w + 2 * pad
    xp = jnp.pad(x, ((0, 0), (pad, pad), (pad, pad), (0, 0)), constant_values=fill)
    xf = xp.reshape(n, hp * wp, c)
    xf = jnp.pad(xf, ((0, 0), (0, wp), (0, 0)), constant_values=fill)
    return xf, hp, wp


def im2col(x, kh, kw, stride, pad):
    """Used only for the few strided non-1x1 convs (stem 7x7/2, three 3x3/2)."""
    n, h, w, c = x.shape
    if pad > 0:
        x = jnp.pad(x, ((0, 0), (pad, pad), (pad, pad), (0, 0)))
    hp, wp = h + 2 * pad, w + 2 * pad
    ho = (hp - kh) // stride + 1
    wo = (wp - kw) // stride + 1
    cols = []
    for i in range(kh):
        for j in range(kw):
            cols.append(x[:, i:i + ho * stride:stride, j:j + wo * stride:stride, :])
    patches = jnp.concatenate(cols, axis=-1)
    return patches.reshape(n * ho * wo, kh * kw * c), (n, ho, wo)


def maxpool_3x3_s2(x):
    """nn.MaxPool2d(kernel_size=3, stride=2, padding=1) on NHWC."""
    n, h, w, c = x.shape
    ho, wo = (h + 2 - 3) // 2 + 1, (w + 2 - 3) // 2 + 1
    xf, hp, wp = _pad_flatten(x, 1, fill=_NEG)
    hof = hp - 2
    y = maxpool_flat(xf, wp=wp, hof=hof)               # stride-1 3x3 max
    y = y.reshape(n, hof, wp, c)[:, ::2, ::2, :][:, :ho, :wo, :]
    return y


# ----------------------------------------------------------------------------
# Layers / model (deterministic synthetic parameters)
# ----------------------------------------------------------------------------
class ConvBN:
    """Conv2d (no bias) + folded eval-mode BatchNorm (+ optional ReLU)."""

    def __init__(self, key, kh, kw, cin, cout, stride, pad, relu):
        self.kh, self.kw, self.cin, self.cout = kh, kw, cin, cout
        self.stride, self.pad, self.relu = stride, pad, relu
        w = jax.random.normal(key, (kh, kw, cin, cout), jnp.float32)
        w = w * jnp.sqrt(2.0 / (kh * kw * cin))                    # He init
        self.w_mat = w.reshape(kh * kw * cin, cout).astype(jnp.bfloat16)
        self.w_taps = w.reshape(kh * kw, cin, cout).astype(jnp.bfloat16)
        eps = 1e-5
        gamma = jnp.ones((cout,), jnp.float32)
        beta = jnp.zeros((cout,), jnp.float32)
        rmean = jnp.zeros((cout,), jnp.float32)
        rvar = jnp.ones((cout,), jnp.float32)
        self.scale = gamma / jnp.sqrt(rvar + eps)
        self.shift = beta - rmean * self.scale

    def __call__(self, x, residual=None):
        """x: NHWC bf16.  If `residual` given: out = relu(bn(conv(x)) + residual)."""
        n, h, w, c = x.shape
        relu = self.relu or (residual is not None)

        if self.kh == 1 and self.kw == 1:
            if self.stride > 1:                    # 1x1 stride-s == subsample + 1x1
                x = x[:, ::self.stride, ::self.stride, :]
                n, h, w, c = x.shape
            res2d = None
            if residual is not None:
                res2d = residual.reshape(n * h * w, self.cout)
            y = matmul_bn_act(x.reshape(n * h * w, c), self.w_mat,
                              self.scale, self.shift, res2d, relu=relu)
            return y.reshape(n, h, w, self.cout)

        if self.stride == 1:
            assert residual is None
            xf, hp, wp = _pad_flatten(x, self.pad)
            ho, wo = hp - self.kh + 1, wp - self.kw + 1
            y = conv2d_direct(xf, self.w_taps, self.scale, self.shift,
                              kh=self.kh, kw=self.kw, wp=wp, ho=ho, relu=relu)
            return y.reshape(n, ho, wp, self.cout)[:, :, :wo, :]

        # strided non-1x1 convs (7x7/2 stem, 3x3/2) -> im2col + tiled matmul
        assert residual is None
        patches, (n2, ho, wo) = im2col(x, self.kh, self.kw, self.stride, self.pad)
        y = matmul_bn_act(patches, self.w_mat, self.scale, self.shift, relu=relu)
        return y.reshape(n2, ho, wo, self.cout)


class Bottleneck:
    def __init__(self, key, cin, width, cout, stride):
        k = jax.random.split(key, 4)
        self.conv1 = ConvBN(k[0], 1, 1, cin, width, 1, 0, relu=True)
        self.conv2 = ConvBN(k[1], 3, 3, width, width, stride, 1, relu=True)
        self.conv3 = ConvBN(k[2], 1, 1, width, cout, 1, 0, relu=False)
        self.down = None
        if stride != 1 or cin != cout:
            self.down = ConvBN(k[3], 1, 1, cin, cout, stride, 0, relu=False)

    def __call__(self, x):
        identity = x if self.down is None else self.down(x)
        y = self.conv2(self.conv1(x))
        # residual add + final ReLU fused into conv3's matmul epilogue
        return self.conv3(y, residual=identity)


class ResNet50Backbone:
    """torchvision resnet50 topology used as a feature extractor (fc=Identity)."""

    def __init__(self, key):
        self.stem = ConvBN(jax.random.fold_in(key, 0), 7, 7, 3, 64, 2, 3, relu=True)
        layer_cfg = [(3, 64, 256, 1), (4, 128, 512, 2),
                     (6, 256, 1024, 2), (3, 512, 2048, 2)]
        self.blocks = []
        cin, ki = 64, 1
        for (nblocks, width, cout, stride) in layer_cfg:
            for b in range(nblocks):
                s = stride if b == 0 else 1
                self.blocks.append(
                    Bottleneck(jax.random.fold_in(key, ki), cin, width, cout, s))
                cin = cout
                ki += 1
        self.fc_in_features = cin  # 2048

    def __call__(self, x_nhwc):
        x = self.stem(x_nhwc)
        x = maxpool_3x3_s2(x)
        for blk in self.blocks:
            x = blk(x)
        n, h, w, c = x.shape
        return global_avg_pool(x.reshape(n, h * w, c))        # [N, 2048]


class ResNetConcatHiddenState:
    def __init__(self, key, resnet_model, original_fc_input_size, num_classes):
        self.resnet = resnet_model
        self.features = original_fc_input_size
        kw_, kb_ = jax.random.split(key)
        bound = 1.0 / float(jnp.sqrt(jnp.float32(original_fc_input_size + 3)))
        # PyTorch Linear(in=F+3, out=num_classes); stored as [in, out].
        self.W = jax.random.uniform(kw_, (original_fc_input_size + 3, num_classes),
                                    jnp.float32, minval=-bound, maxval=bound
                                    ).astype(jnp.bfloat16)
        self.b = jax.random.uniform(kb_, (num_classes,), jnp.float32,
                                    minval=-bound, maxval=bound)
        self.ones = jnp.ones((num_classes,), jnp.float32)

    def __call__(self, image_nchw, metadata):
        x = jnp.transpose(image_nchw, (0, 2, 3, 1)).astype(jnp.bfloat16)  # NCHW->NHWC
        feat = self.resnet(x)                                 # [N, 2048]
        age = metadata[:, 0:1]
        sex = metadata[:, 1:2]
        view = metadata[:, 2:3]
        meta3 = jnp.concatenate([age, sex, view], axis=1).astype(jnp.bfloat16)
        combined = jnp.concatenate([feat, meta3], axis=1)     # [N, 2051]
        # classifier == matmul kernel with scale=1, shift=bias; lane dim padded
        # to 128 inside matmul_bn_act so stores stay dense.
        logits = matmul_bn_act(combined, self.W, self.ones, self.b, relu=False)
        return logits.astype(jnp.float32)


# ----------------------------------------------------------------------------
if __name__ == "__main__":
    label_names = ['Atelectasis', 'Cardiomegaly', 'Consolidation', 'Edema',
                   'Effusion', 'Emphysema', 'Fibrosis', 'Hernia', 'Infiltration',
                   'Mass', 'No Finding', 'Nodule', 'Pleural_Thickening',
                   'Pneumonia', 'Pneumothorax']
    num_classes = len(label_names)  # 15

    root = jax.random.PRNGKey(0)
    k_backbone, k_head, k_img, k_meta = jax.random.split(root, 4)

    backbone = ResNet50Backbone(k_backbone)
    model = ResNetConcatHiddenState(k_head, backbone,
                                    original_fc_input_size=backbone.fc_in_features,
                                    num_classes=num_classes)

    # Small deterministic inputs: image NCHW (PyTorch convention), metadata [N, 3].
    image = jax.random.normal(k_img, (2, 3, 16, 16), jnp.float32)
    metadata = jax.random.normal(k_meta, (2, 3), jnp.float32)

    logits = model(image, metadata)
    jax.block_until_ready(logits)
    assert logits.shape == (2, num_classes) and logits.dtype == jnp.float32
    assert bool(jnp.all(jnp.isfinite(logits)))
    print("KERNEL_OK")
</pallas_src>

<mosaic_0001>
module attributes {stable_mosaic.version = 11 : i64} {
  func.func @_mm_bn_kernel(%arg0: i32, %arg1: i32, %arg2: i32, %arg3: memref<128x256xbf16, #tpu.memory_space<vmem>>, %arg4: memref<256x128xbf16, #tpu.memory_space<vmem>>, %arg5: memref<1x128xf32, #tpu.memory_space<vmem>>, %arg6: memref<1x128xf32, #tpu.memory_space<vmem>>, %arg7: memref<128x128xbf16, #tpu.memory_space<vmem>>, %arg8: memref<128x128xf32, #tpu.memory_space<vmem>>) attributes {dimension_semantics = [#tpu.dimension_semantics<parallel>, #tpu.dimension_semantics<parallel>, #tpu.dimension_semantics<arbitrary>], iteration_bounds = array<i64: 1, 1, 1>, scalar_prefetch = 0 : i64, scratch_operands = 1 : i64, tpu.core_type = #tpu.core_type<tc>, window_params = [{transform_indices = @transform_0, window_bounds = array<i64: 128, 256>}, {transform_indices = @transform_1, window_bounds = array<i64: 256, 128>}, {transform_indices = @transform_2, window_bounds = array<i64: 1, 128>}, {transform_indices = @transform_3, window_bounds = array<i64: 1, 128>}, {transform_indices = @transform_4, window_bounds = array<i64: 128, 128>}]} {
    %c0_i32 = arith.constant 0 : i32
    %0 = arith.cmpi eq, %arg2, %c0_i32 : i32
    %1 = arith.extui %0 : i1 to i32
    %c0_i32_0 = arith.constant 0 : i32
    %2 = arith.cmpi ne, %1, %c0_i32_0 : i32
    scf.if %2 {
      %cst_10 = arith.constant 0.000000e+00 : f32
      %12 = vector.broadcast %cst_10 : f32 to vector<128x128xf32>
      %c0_11 = arith.constant 0 : index
      %c0_12 = arith.constant 0 : index
      %13 = vector.load %arg8[%c0_11, %c0_12] : memref<128x128xf32, #tpu.memory_space<vmem>>, vector<128x128xf32>
      tpu.vector_store %arg8[%c0_11, %c0_12], %12 {strides = array<i32>} : memref<128x128xf32, #tpu.memory_space<vmem>>, vector<128x128xf32>,
    } else {
    }
    %c0 = arith.constant 0 : index
    %c0_1 = arith.constant 0 : index
    %3 = vector.load %arg8[%c0, %c0_1] : memref<128x128xf32, #tpu.memory_space<vmem>>, vector<128x128xf32>
    %c0_2 = arith.constant 0 : index
    %c0_3 = arith.constant 0 : index
    %4 = vector.load %arg3[%c0_2, %c0_3] : memref<128x256xbf16, #tpu.memory_space<vmem>>, vector<128x256xbf16>
    %c0_4 = arith.constant 0 : index
    %c0_5 = arith.constant 0 : index
    %5 = vector.load %arg4[%c0_4, %c0_5] : memref<256x128xbf16, #tpu.memory_space<vmem>>, vector<256x128xbf16>
    %cst = arith.constant dense<0.000000e+00> : vector<128x128xf32>
    %6 = tpu.matmul %4, %5, %cst {dimension_numbers = #tpu.dot_dimension_numbers<[1], [0], [0], [1], [0, 0, 1, 1], [], []>} : vector<128x256xbf16>, vector<256x128xbf16>, vector<128x128xf32> -> vector<128x128xf32>
    %7 = arith.addf %3, %6 : vector<128x128xf32>
    %c0_6 = arith.constant 0 : index
    %c0_7 = arith.constant 0 : index
    %8 = vector.load %arg8[%c0_6, %c0_7] : memref<128x128xf32, #tpu.memory_space<vmem>>, vector<128x128xf32>
    tpu.vector_store %arg8[%c0_6, %c0_7], %7 {strides = array<i32>} : memref<128x128xf32, #tpu.memory_space<vmem>>, vector<128x128xf32>,
    %c0_i32_8 = arith.constant 0 : i32
    %9 = arith.cmpi eq, %arg2, %c0_i32_8 : i32
    %10 = arith.extui %9 : i1 to i32
    %c0_i32_9 = arith.constant 0 : i32
    %11 = arith.cmpi ne, %10, %c0_i32_9 : i32
    scf.if %11 {
      %c0_10 = arith.constant 0 : index
      %c0_11 = arith.constant 0 : index
      %12 = vector.load %arg8[%c0_10, %c0_11] : memref<128x128xf32, #tpu.memory_space<vmem>>, vector<128x128xf32>
      %c0_12 = arith.constant 0 : index
      %c0_13 = arith.constant 0 : index
      %13 = vector.load %arg5[%c0_12, %c0_13] : memref<1x128xf32, #tpu.memory_space<vmem>>, vector<1x128xf32>
      %14 = vector.broadcast %13 : vector<1x128xf32> to vector<128x128xf32>
      %15 = arith.mulf %12, %14 : vector<128x128xf32>
      %c0_14 = arith.constant 0 : index
      %c0_15 = arith.constant 0 : index
      %16 = vector.load %arg6[%c0_14, %c0_15] : memref<1x128xf32, #tpu.memory_space<vmem>>, vector<1x128xf32>
      %17 = vector.broadcast %16 : vector<1x128xf32> to vector<128x128xf32>
      %18 = arith.addf %15, %17 : vector<128x128xf32>
      %cst_16 = arith.constant 0.000000e+00 : f32
      %19 = vector.broadcast %cst_16 : f32 to vector<128x128xf32>
      %20 = arith.maximumf %18, %19 : vector<128x128xf32>
      %21 = arith.truncf %20 : vector<128x128xf32> to vector<128x128xbf16>
      %c0_17 = arith.constant 0 : index
      %c0_18 = arith.constant 0 : index
      %22 = vector.load %arg7[%c0_17, %c0_18] : memref<128x128xbf16, #tpu.memory_space<vmem>>, vector<128x128xbf16>
      tpu.vector_store %arg7[%c0_17, %c0_18], %21 {strides = array<i32>} : memref<128x128xbf16, #tpu.memory_space<vmem>>, vector<128x128xbf16>,
    } else {
    }
    return
  }
  func.func @transform_0(%arg0: i32, %arg1: i32, %arg2: i32) -> (i32, i32) {
    %c0_i32 = arith.constant 0 : i32
    return %arg0, %arg2 : i32, i32
  }
  func.func @transform_1(%arg0: i32, %arg1: i32, %arg2: i32) -> (i32, i32) {
    %c0_i32 = arith.constant 0 : i32
    return %arg2, %arg1 : i32, i32
  }
  func.func @transform_2(%arg0: i32, %arg1: i32, %arg2: i32) -> (i32, i32) {
    %c0_i32 = arith.constant 0 : i32
    %c0_i32_0 = arith.constant 0 : i32
    return %c0_i32, %arg1 : i32, i32
  }
  func.func @transform_3(%arg0: i32, %arg1: i32, %arg2: i32) -> (i32, i32) {
    %c0_i32 = arith.constant 0 : i32
    %c0_i32_0 = arith.constant 0 : i32
    return %c0_i32, %arg1 : i32, i32
  }
  func.func @transform_4(%arg0: i32, %arg1: i32, %arg2: i32) -> (i32, i32) {
    %c0_i32 = arith.constant 0 : i32
    return %arg0, %arg1 : i32, i32
  }
}

</mosaic_0001>

<llo_original>
// kernel: matmul_bn_act.1
$region0: #{matmul_bn_act.1}
  #allocation0 [shape = 'u32[]', space=smem, size = 0x4, offset = 0x4, fixed_abs, tag = 'smem constant byte address 0x4 - core index']
  #allocation1 [shape = 'u32[144,128]{1,0:T(1,128)}', space=vmem, size = 0x12000, scoped, tag = 'internal scratch']
  #allocation2 [shape = 'f32[128,128]{1,0:T(8,128)}', space=vmem, size = 0x10000, scoped, tag = 'scratch operand']
  %s0 = inlined_call_operand.vmem [shape: bf16[128,256], index: 0, kind: input, shape index: {}]
  %s1 = inlined_call_operand.vmem [shape: bf16[256,128], index: 1, kind: input, shape index: {}]
  %s2 = inlined_call_operand.vmem [shape: f32[1,128], index: 2, kind: input, shape index: {}]
  %s3 = inlined_call_operand.vmem [shape: f32[1,128], index: 3, kind: input, shape index: {}]
  %s4 = inlined_call_operand.vmem [shape: bf16[128,128], index: 4, kind: output, shape index: {}]
  %s5 = sld [smem:[#allocation0]]
  $region34: #{matmul_bn_act.1} parent=0
    _
  %s7 = ssub.s32 1, %s5
  %s8 = scalar_select 0, %s7, %s5
  // Predicated region
  $region2: #{matmul_bn_act.1} parent=0 // pred_check
    _
  $region3: #{matmul_bn_act.1} parent=0 // pred_check_branch
    %10 = sbr.rel (0) target = $region5
  $region4: #{matmul_bn_act.1} parent=0 // pred_region
    _
  $region5: #{matmul_bn_act.1} parent=0 // pred_fallthru
    _
  // Predicated region
  $region6: #{matmul_bn_act.1} parent=0 // pred_check
    _
  $region7: #{matmul_bn_act.1} parent=0 // pred_check_branch
    %12 = sbr.rel (0) target = $region9
  $region8: #{matmul_bn_act.1} parent=0 // pred_region
    _
  $region9: #{matmul_bn_act.1} parent=0 // pred_fallthru
    _
  // Predicated region
  $region10: #{matmul_bn_act.1} parent=0 // pred_check
    _
  $region11: #{matmul_bn_act.1} parent=0 // pred_check_branch
    %14 = sbr.rel (0) target = $region13
  $region12: #{matmul_bn_act.1} parent=0 // pred_region
    _
  $region13: #{matmul_bn_act.1} parent=0 // pred_fallthru
    _
  // Predicated region
  $region14: #{matmul_bn_act.1} parent=0 // pred_check
    _
  $region15: #{matmul_bn_act.1} parent=0 // pred_check_branch
    %16 = sbr.rel (0) target = $region17
  $region16: #{matmul_bn_act.1} parent=0 // pred_region
    _
  $region17: #{matmul_bn_act.1} parent=0 // pred_fallthru
    _
  %p18 = scmp.eq.s32.totalorder 0, 0
  // Predicated region
  $region18: #{matmul_bn_act.1} parent=0 // pred_check
    %p19 = pneg %p18
  $region19: #{matmul_bn_act.1} parent=0 // pred_check_branch
    %21 = sbr.rel (%p19) target = $region21
  $region20: #{matmul_bn_act.1} parent=0 // pred_region
    %22 = vst [vmem:[#allocation2] sm:$0xff] 0.0
    %23 = vst [vmem:[#allocation2 + $0x8] sm:$0xff] 0.0
    %24 = vst [vmem:[#allocation2 + $0x10] sm:$0xff] 0.0
    %25 = vst [vmem:[#allocation2 + $0x18] sm:$0xff] 0.0
    %26 = vst [vmem:[#allocation2 + $0x20] sm:$0xff] 0.0
    %27 = vst [vmem:[#allocation2 + $0x28] sm:$0xff] 0.0
    %28 = vst [vmem:[#allocation2 + $0x30] sm:$0xff] 0.0
    %29 = vst [vmem:[#allocation2 + $0x38] sm:$0xff] 0.0
    %30 = vst [vmem:[#allocation2 + $0x40] sm:$0xff] 0.0
    %31 = vst [vmem:[#allocation2 + $0x48] sm:$0xff] 0.0
    %32 = vst [vmem:[#allocation2 + $0x50] sm:$0xff] 0.0
    %33 = vst [vmem:[#allocation2 + $0x58] sm:$0xff] 0.0
    %34 = vst [vmem:[#allocation2 + $0x60] sm:$0xff] 0.0
    %35 = vst [vmem:[#allocation2 + $0x68] sm:$0xff] 0.0
    %36 = vst [vmem:[#allocation2 + $0x70] sm:$0xff] 0.0
    %37 = vst [vmem:[#allocation2 + $0x78] sm:$0xff] 0.0
  $region21: #{matmul_bn_act.1} parent=0 // pred_fallthru
    _
  %v38 = vld [vmem:[#allocation2] sm:$0xff]
  %v39 = vld [vmem:[#allocation2 + $0x8] sm:$0xff]
  %v40 = vld [vmem:[#allocation2 + $0x10] sm:$0xff]
  %v41 = vld [vmem:[#allocation2 + $0x18] sm:$0xff]
  %v42 = vld [vmem:[#allocation2 + $0x20] sm:$0xff]
  %v43 = vld [vmem:[#allocation2 + $0x28] sm:$0xff]
  %v44 = vld [vmem:[#allocation2 + $0x30] sm:$0xff]
  %v45 = vld [vmem:[#allocation2 + $0x38] sm:$0xff]
  %v46 = vld [vmem:[#allocation2 + $0x40] sm:$0xff]
  %v47 = vld [vmem:[#allocation2 + $0x48] sm:$0xff]
  %v48 = vld [vmem:[#allocation2 + $0x50] sm:$0xff]
  %v49 = vld [vmem:[#allocation2 + $0x58] sm:$0xff]
  %v50 = vld [vmem:[#allocation2 + $0x60] sm:$0xff]
  %v51 = vld [vmem:[#allocation2 + $0x68] sm:$0xff]
  %v52 = vld [vmem:[#allocation2 + $0x70] sm:$0xff]
  %v53 = vld [vmem:[#allocation2 + $0x78] sm:$0xff]
  %v54 = vld [vmem:[%s0] sm:$0xff]
  %v55 = vld [vmem:[%s0 + $0x8] sm:$0xff]
  %v56 = vld [vmem:[%s0 + $0x10] sm:$0xff]
  %v57 = vld [vmem:[%s0 + $0x18] sm:$0xff]
  %v58 = vld [vmem:[%s0 + $0x20] sm:$0xff]
  %v59 = vld [vmem:[%s0 + $0x28] sm:$0xff]
  %v60 = vld [vmem:[%s0 + $0x30] sm:$0xff]
  %v61 = vld [vmem:[%s0 + $0x38] sm:$0xff]
  %v62 = vld [vmem:[%s0 + $0x40] sm:$0xff]
  %v63 = vld [vmem:[%s0 + $0x48] sm:$0xff]
  %v64 = vld [vmem:[%s0 + $0x50] sm:$0xff]
  %v65 = vld [vmem:[%s0 + $0x58] sm:$0xff]
  %v66 = vld [vmem:[%s0 + $0x60] sm:$0xff]
  %v67 = vld [vmem:[%s0 + $0x68] sm:$0xff]
  %v68 = vld [vmem:[%s0 + $0x70] sm:$0xff]
  %v69 = vld [vmem:[%s0 + $0x78] sm:$0xff]
  %v70 = vld [vmem:[%s1] sm:$0xf]
  %v71 = vld [vmem:[%s1 + $0x4] sm:$0xf]
  %v72 = vld [vmem:[%s1 + $0x8] sm:$0xf]
  %v73 = vld [vmem:[%s1 + $0xc] sm:$0xf]
  %v74 = vld [vmem:[%s1 + $0x10] sm:$0xf]
  %v75 = vld [vmem:[%s1 + $0x14] sm:$0xf]
  %v76 = vld [vmem:[%s1 + $0x18] sm:$0xf]
  %v77 = vld [vmem:[%s1 + $0x1c] sm:$0xf]
  %v78 = vld [vmem:[%s1 + $0x20] sm:$0xf]
  %v79 = vld [vmem:[%s1 + $0x24] sm:$0xf]
  %v80 = vld [vmem:[%s1 + $0x28] sm:$0xf]
  %v81 = vld [vmem:[%s1 + $0x2c] sm:$0xf]
  %v82 = vld [vmem:[%s1 + $0x30] sm:$0xf]
  %v83 = vld [vmem:[%s1 + $0x34] sm:$0xf]
  %v84 = vld [vmem:[%s1 + $0x38] sm:$0xf]
  %v85 = vld [vmem:[%s1 + $0x3c] sm:$0xf]
  %v86 = vld [vmem:[%s1 + $0x40] sm:$0xf]
  %v87 = vld [vmem:[%s1 + $0x44] sm:$0xf]
  %v88 = vld [vmem:[%s1 + $0x48] sm:$0xf]
  %v89 = vld [vmem:[%s1 + $0x4c] sm:$0xf]
  %v90 = vld [vmem:[%s1 + $0x50] sm:$0xf]
  %v91 = vld [vmem:[%s1 + $0x54] sm:$0xf]
  %v92 = vld [vmem:[%s1 + $0x58] sm:$0xf]
  %v93 = vld [vmem:[%s1 + $0x5c] sm:$0xf]
  %v94 = vld [vmem:[%s1 + $0x60] sm:$0xf]
  %v95 = vld [vmem:[%s1 + $0x64] sm:$0xf]
  %v96 = vld [vmem:[%s1 + $0x68] sm:$0xf]
  %v97 = vld [vmem:[%s1 + $0x6c] sm:$0xf]
  %v98 = vld [vmem:[%s1 + $0x70] sm:$0xf]
  %v99 = vld [vmem:[%s1 + $0x74] sm:$0xf]
  %v100 = vld [vmem:[%s1 + $0x78] sm:$0xf]
  %v101 = vld [vmem:[%s1 + $0x7c] sm:$0xf]
  %v118 = vunpack.c.l.b16 %v54
  %v119 = vunpack.c.h.b16 %v54
  %v120 = vunpack.c.l.b16 %v55
  %v121 = vunpack.c.h.b16 %v55
  %v122 = vunpack.c.l.b16 %v56
  %v123 = vunpack.c.h.b16 %v56
  %v124 = vunpack.c.l.b16 %v57
  %v125 = vunpack.c.h.b16 %v57
  %v126 = vunpack.c.l.b16 %v58
  %v127 = vunpack.c.h.b16 %v58
  %v128 = vunpack.c.l.b16 %v59
  %v129 = vunpack.c.h.b16 %v59
  %v130 = vunpack.c.l.b16 %v60
  %v131 = vunpack.c.h.b16 %v60
  %v132 = vunpack.c.l.b16 %v61
  %v133 = vunpack.c.h.b16 %v61
  %v134 = vunpack.c.l.b16 %v62
  %v135 = vunpack.c.h.b16 %v62
  %v136 = vunpack.c.l.b16 %v63
  %v137 = vunpack.c.h.b16 %v63
  %v138 = vunpack.c.l.b16 %v64
  %v139 = vunpack.c.h.b16 %v64
  %v140 = vunpack.c.l.b16 %v65
  %v141 = vunpack.c.h.b16 %v65
  %v142 = vunpack.c.l.b16 %v66
  %v143 = vunpack.c.h.b16 %v66
  %v144 = vunpack.c.l.b16 %v67
  %v145 = vunpack.c.h.b16 %v67
  %v146 = vunpack.c.l.b16 %v68
  %v147 = vunpack.c.h.b16 %v68
  %v148 = vunpack.c.l.b16 %v69
  %v149 = vunpack.c.h.b16 %v69
  %v150 = vpack.c.b16 %v120, %v118
  %v151 = vpack.c.b16 %v121, %v119
  %v152 = vpack.c.b16 %v124, %v122
  %v153 = vpack.c.b16 %v125, %v123
  %v154 = vpack.c.b16 %v128, %v126
  %v155 = vpack.c.b16 %v129, %v127
  %v156 = vpack.c.b16 %v132, %v130
  %v157 = vpack.c.b16 %v133, %v131
  %v158 = vpack.c.b16 %v136, %v134
  %v159 = vpack.c.b16 %v137, %v135
  %v160 = vpack.c.b16 %v140, %v138
  %v161 = vpack.c.b16 %v141, %v139
  %v162 = vpack.c.b16 %v144, %v142
  %v163 = vpack.c.b16 %v145, %v143
  %v164 = vpack.c.b16 %v148, %v146
  %v165 = vpack.c.b16 %v149, %v147
  %v214 = vunpack.c.l.b16 %v70
  %v215 = vunpack.c.l.b16 %v71
  %v216 = vunpack.c.l.b16 %v72
  %v217 = vunpack.c.l.b16 %v73
  %v218 = vunpack.c.l.b16 %v74
  %v219 = vunpack.c.l.b16 %v75
  %v220 = vunpack.c.l.b16 %v76
  %v221 = vunpack.c.l.b16 %v77
  %v222 = vunpack.c.l.b16 %v78
  %v223 = vunpack.c.l.b16 %v79
  %v224 = vunpack.c.l.b16 %v80
  %v225 = vunpack.c.l.b16 %v81
  %v226 = vunpack.c.l.b16 %v82
  %v227 = vunpack.c.l.b16 %v83
  %v228 = vunpack.c.l.b16 %v84
  %v229 = vunpack.c.l.b16 %v85
  %v230 = vunpack.c.l.b16 %v86
  %v231 = vunpack.c.l.b16 %v87
  %v232 = vunpack.c.l.b16 %v88
  %v233 = vunpack.c.l.b16 %v89
  %v234 = vunpack.c.l.b16 %v90
  %v235 = vunpack.c.l.b16 %v91
  %v236 = vunpack.c.l.b16 %v92
  %v237 = vunpack.c.l.b16 %v93
  %v238 = vunpack.c.l.b16 %v94
  %v239 = vunpack.c.l.b16 %v95
  %v240 = vunpack.c.l.b16 %v96
  %v241 = vunpack.c.l.b16 %v97
  %v242 = vunpack.c.l.b16 %v98
  %v243 = vunpack.c.l.b16 %v99
  %v244 = vunpack.c.l.b16 %v100
  %v245 = vunpack.c.l.b16 %v101
  %v246 = vpack.c.b16 %v215, %v214
  %v247 = vpack.c.b16 %v217, %v216
  %v248 = vpack.c.b16 %v219, %v218
  %v249 = vpack.c.b16 %v221, %v220
  %v250 = vpack.c.b16 %v223, %v222
  %v251 = vpack.c.b16 %v225, %v224
  %v252 = vpack.c.b16 %v227, %v226
  %v253 = vpack.c.b16 %v229, %v228
  %v254 = vpack.c.b16 %v231, %v230
  %v255 = vpack.c.b16 %v233, %v232
  %v256 = vpack.c.b16 %v235, %v234
  %v257 = vpack.c.b16 %v237, %v236
  %v258 = vpack.c.b16 %v239, %v238
  %v259 = vpack.c.b16 %v241, %v240
  %v260 = vpack.c.b16 %v243, %v242
  %v261 = vpack.c.b16 %v245, %v244
  %278 = vmatprep.subr.bf16.mxu0 0
  %279 = vmatpush1.bf16.msra.mxu0 %v246
  %280 = vmatprep.subr.bf16.mxu0 0
  %281 = vmatpush1.bf16.msra.mxu0 %v247
  %282 = vmatprep.subr.bf16.mxu0 0
  %283 = vmatpush1.bf16.msra.mxu0 %v248
  %284 = vmatprep.subr.bf16.mxu0 0
  %285 = vmatpush1.bf16.msra.mxu0 %v249
  %286 = vmatprep.subr.bf16.mxu0 0
  %287 = vmatpush1.bf16.msra.mxu0 %v250
  %288 = vmatprep.subr.bf16.mxu0 0
  %289 = vmatpush1.bf16.msra.mxu0 %v251
  %290 = vmatprep.subr.bf16.mxu0 0
  %291 = vmatpush1.bf16.msra.mxu0 %v252
  %292 = vmatprep.subr.bf16.mxu0 0
  %293 = vmatpush1.bf16.msra.mxu0 %v253
  %294 = vmatprep.subr.bf16.mxu0 0
  %295 = vmatpush1.bf16.msra.mxu0 %v254
  %296 = vmatprep.subr.bf16.mxu0 0
  %297 = vmatpush1.bf16.msra.mxu0 %v255
  %298 = vmatprep.subr.bf16.mxu0 0
  %299 = vmatpush1.bf16.msra.mxu0 %v256
  %300 = vmatprep.subr.bf16.mxu0 0
  %301 = vmatpush1.bf16.msra.mxu0 %v257
  %302 = vmatprep.subr.bf16.mxu0 0
  %303 = vmatpush1.bf16.msra.mxu0 %v258
  %304 = vmatprep.subr.bf16.mxu0 0
  %305 = vmatpush1.bf16.msra.mxu0 %v259
  %306 = vmatprep.subr.bf16.mxu0 0
  %307 = vmatpush1.bf16.msra.mxu0 %v260
  %308 = vmatprep.subr.bf16.mxu0 0
  %309 = vmatpush1.bf16.msra.mxu0 %v261
  %310 = vmatprep.mubr.bf16.mxu0 %v151
  %311 = vmatmul.mubr.bf16.gmra.mrb[0].mxu0 %v150
  %v312 = vpop.f32.mrb[0].mxu0
  %v313 = vadd.f32 0.0, %v312
  %v314 = vpop.f32.mrb[0].mxu0
  %v315 = vpop.f32.mrb[0].mxu0
  %v316 = vadd.f32 0.0, %v315
  %v317 = vpop.f32.mrb[0].mxu0
  %318 = vmatprep.mubr.bf16.mxu0 %v153
  %319 = vmatmul.mubr.bf16.gmra.mrb[0].mxu0 %v152
  %v320 = vpop.f32.mrb[0].mxu0
  %v321 = vadd.f32 0.0, %v320
  %v322 = vpop.f32.mrb[0].mxu0
  %v323 = vpop.f32.mrb[0].mxu0
  %v324 = vadd.f32 0.0, %v323
  %v325 = vpop.f32.mrb[0].mxu0
  %326 = vmatprep.mubr.bf16.mxu0 %v155
  %327 = vmatmul.mubr.bf16.gmra.mrb[0].mxu0 %v154
  %v328 = vpop.f32.mrb[0].mxu0
  %v329 = vadd.f32 0.0, %v328
  %v330 = vpop.f32.mrb[0].mxu0
  %v331 = vpop.f32.mrb[0].mxu0
  %v332 = vadd.f32 0.0, %v331
  %v333 = vpop.f32.mrb[0].mxu0
  %334 = vmatprep.mubr.bf16.mxu0 %v157
  %335 = vmatmul.mubr.bf16.gmra.mrb[0].mxu0 %v156
  %v336 = vpop.f32.mrb[0].mxu0
  %v337 = vadd.f32 0.0, %v336
  %v338 = vpop.f32.mrb[0].mxu0
  %v339 = vpop.f32.mrb[0].mxu0
  %v340 = vadd.f32 0.0, %v339
  %v341 = vpop.f32.mrb[0].mxu0
  %342 = vmatprep.mubr.bf16.mxu0 %v159
  %343 = vmatmul.mubr.bf16.gmra.mrb[0].mxu0 %v158
  %v344 = vpop.f32.mrb[0].mxu0
  %v345 = vadd.f32 0.0, %v344
  %v346 = vpop.f32.mrb[0].mxu0
  %v347 = vpop.f32.mrb[0].mxu0
  %v348 = vadd.f32 0.0, %v347
  %v349 = vpop.f32.mrb[0].mxu0
  %350 = vmatprep.mubr.bf16.mxu0 %v161
  %351 = vmatmul.mubr.bf16.gmra.mrb[0].mxu0 %v160
  %v352 = vpop.f32.mrb[0].mxu0
  %v353 = vadd.f32 0.0, %v352
  %v354 = vpop.f32.mrb[0].mxu0
  %v355 = vpop.f32.mrb[0].mxu0
  %v356 = vadd.f32 0.0, %v355
  %v357 = vpop.f32.mrb[0].mxu0
  %358 = vmatprep.mubr.bf16.mxu0 %v163
  %359 = vmatmul.mubr.bf16.gmra.mrb[0].mxu0 %v162
  %v360 = vpop.f32.mrb[0].mxu0
  %v361 = vadd.f32 0.0, %v360
  %v362 = vpop.f32.mrb[0].mxu0
  %v363 = vpop.f32.mrb[0].mxu0
  %v364 = vadd.f32 0.0, %v363
  %v365 = vpop.f32.mrb[0].mxu0
  %366 = vmatprep.mubr.bf16.mxu0 %v165
  %367 = vmatmul.mubr.bf16.gmra.mrb[0].mxu0 %v164
  %v368 = vpop.f32.mrb[0].mxu0
  %v369 = vadd.f32 0.0, %v368
  %v370 = vpop.f32.mrb[0].mxu0
  %v371 = vpop.f32.mrb[0].mxu0
  %v372 = vadd.f32 0.0, %v371
  %v373 = vpop.f32.mrb[0].mxu0
  %374 = vdwg.mxu0
  %v375 = vadd.f32 %v38, %v313
  %v376 = vadd.f32 %v39, %v316
  %v377 = vadd.f32 %v40, %v321
  %v378 = vadd.f32 %v41, %v324
  %v379 = vadd.f32 %v42, %v329
  %v380 = vadd.f32 %v43, %v332
  %v381 = vadd.f32 %v44, %v337
  %v382 = vadd.f32 %v45, %v340
  %v383 = vadd.f32 %v46, %v345
  %v384 = vadd.f32 %v47, %v348
  %v385 = vadd.f32 %v48, %v353
  %v386 = vadd.f32 %v49, %v356
  %v387 = vadd.f32 %v50, %v361
  %v388 = vadd.f32 %v51, %v364
  %v389 = vadd.f32 %v52, %v369
  %v390 = vadd.f32 %v53, %v372
  %391 = vst [vmem:[#allocation2] sm:$0xff] %v375
  %392 = vst [vmem:[#allocation2 + $0x8] sm:$0xff] %v376
  %393 = vst [vmem:[#allocation2 + $0x10] sm:$0xff] %v377
  %394 = vst [vmem:[#allocation2 + $0x18] sm:$0xff] %v378
  %395 = vst [vmem:[#allocation2 + $0x20] sm:$0xff] %v379
  %396 = vst [vmem:[#allocation2 + $0x28] sm:$0xff] %v380
  %397 = vst [vmem:[#allocation2 + $0x30] sm:$0xff] %v381
  %398 = vst [vmem:[#allocation2 + $0x38] sm:$0xff] %v382
  %399 = vst [vmem:[#allocation2 + $0x40] sm:$0xff] %v383
  %400 = vst [vmem:[#allocation2 + $0x48] sm:$0xff] %v384
  %401 = vst [vmem:[#allocation2 + $0x50] sm:$0xff] %v385
  %402 = vst [vmem:[#allocation2 + $0x58] sm:$0xff] %v386
  %403 = vst [vmem:[#allocation2 + $0x60] sm:$0xff] %v387
  %404 = vst [vmem:[#allocation2 + $0x68] sm:$0xff] %v388
  %405 = vst [vmem:[#allocation2 + $0x70] sm:$0xff] %v389
  %406 = vst [vmem:[#allocation2 + $0x78] sm:$0xff] %v390
  // Predicated region
  $region22: #{matmul_bn_act.1} parent=0 // pred_check
    %p407 = pneg %p18
  $region23: #{matmul_bn_act.1} parent=0 // pred_check_branch
    %409 = sbr.rel (%p407) target = $region25
  $region24: #{matmul_bn_act.1} parent=0 // pred_region
    %v410 = vld [vmem:[#allocation2] sm:$0xff]
    %v411 = vld [vmem:[#allocation2 + $0x8] sm:$0xff]
    %v412 = vld [vmem:[#allocation2 + $0x10] sm:$0xff]
    %v413 = vld [vmem:[#allocation2 + $0x18] sm:$0xff]
    %v414 = vld [vmem:[#allocation2 + $0x20] sm:$0xff]
    %v415 = vld [vmem:[#allocation2 + $0x28] sm:$0xff]
    %v416 = vld [vmem:[#allocation2 + $0x30] sm:$0xff]
    %v417 = vld [vmem:[#allocation2 + $0x38] sm:$0xff]
    %v418 = vld [vmem:[#allocation2 + $0x40] sm:$0xff]
    %v419 = vld [vmem:[#allocation2 + $0x48] sm:$0xff]
    %v420 = vld [vmem:[#allocation2 + $0x50] sm:$0xff]
    %v421 = vld [vmem:[#allocation2 + $0x58] sm:$0xff]
    %v422 = vld [vmem:[#allocation2 + $0x60] sm:$0xff]
    %v423 = vld [vmem:[#allocation2 + $0x68] sm:$0xff]
    %v424 = vld [vmem:[#allocation2 + $0x70] sm:$0xff]
    %v425 = vld [vmem:[#allocation2 + $0x78] sm:$0xff]
    %v426 = vld [vmem:[%s2] sm:$0x1]
    %v428 = vlaneseq
    %v429 = vshrl.u32 %v428, 7
    %v430 = vsub.s32 0, %v429
    %v431 = vrot.slane %v426, %v430
    %v433 = vmul.f32 %v410, %v431
    %v434 = vmul.f32 %v411, %v431
    %v435 = vmul.f32 %v412, %v431
    %v436 = vmul.f32 %v413, %v431
    %v437 = vmul.f32 %v414, %v431
    %v438 = vmul.f32 %v415, %v431
    %v439 = vmul.f32 %v416, %v431
    %v440 = vmul.f32 %v417, %v431
    %v441 = vmul.f32 %v418, %v431
    %v442 = vmul.f32 %v419, %v431
    %v443 = vmul.f32 %v420, %v431
    %v444 = vmul.f32 %v421, %v431
    %v445 = vmul.f32 %v422, %v431
    %v446 = vmul.f32 %v423, %v431
    %v447 = vmul.f32 %v424, %v431
    %v448 = vmul.f32 %v425, %v431
    %v449 = vld [vmem:[%s3] sm:$0x1]
    %v451 = vlaneseq
    %v452 = vshrl.u32 %v451, 7
    %v453 = vsub.s32 0, %v452
    %v454 = vrot.slane %v449, %v453
    %v456 = vadd.f32 %v433, %v454
    %v457 = vadd.f32 %v434, %v454
    %v458 = vadd.f32 %v435, %v454
    %v459 = vadd.f32 %v436, %v454
    %v460 = vadd.f32 %v437, %v454
    %v461 = vadd.f32 %v438, %v454
    %v462 = vadd.f32 %v439, %v454
    %v463 = vadd.f32 %v440, %v454
    %v464 = vadd.f32 %v441, %v454
    %v465 = vadd.f32 %v442, %v454
    %v466 = vadd.f32 %v443, %v454
    %v467 = vadd.f32 %v444, %v454
    %v468 = vadd.f32 %v445, %v454
    %v469 = vadd.f32 %v446, %v454
    %v470 = vadd.f32 %v447, %v454
    %v471 = vadd.f32 %v448, %v454
    %v472 = vmax.f32 %v456, 0.0
    %v473 = vmax.f32 %v457, 0.0
    %v474 = vmax.f32 %v458, 0.0
    %v475 = vmax.f32 %v459, 0.0
    %v476 = vmax.f32 %v460, 0.0
    %v477 = vmax.f32 %v461, 0.0
    %v478 = vmax.f32 %v462, 0.0
    %v479 = vmax.f32 %v463, 0.0
    %v480 = vmax.f32 %v464, 0.0
    %v481 = vmax.f32 %v465, 0.0
    %v482 = vmax.f32 %v466, 0.0
    %v483 = vmax.f32 %v467, 0.0
    %v484 = vmax.f32 %v468, 0.0
    %v485 = vmax.f32 %v469, 0.0
    %v486 = vmax.f32 %v470, 0.0
    %v487 = vmax.f32 %v471, 0.0
    %v488 = vpack.c.bf16 %v473, %v472
    %v489 = vpack.c.bf16 %v475, %v474
    %v490 = vpack.c.bf16 %v477, %v476
    %v491 = vpack.c.bf16 %v479, %v478
    %v492 = vpack.c.bf16 %v481, %v480
    %v493 = vpack.c.bf16 %v483, %v482
    %v494 = vpack.c.bf16 %v485, %v484
    %v495 = vpack.c.bf16 %v487, %v486
    %v504 = vunpack.c.l.b16 %v488
    %v505 = vunpack.c.h.b16 %v488
    %v506 = vunpack.c.l.b16 %v489
    %v507 = vunpack.c.h.b16 %v489
    %v508 = vunpack.c.l.b16 %v490
    %v509 = vunpack.c.h.b16 %v490
    %v510 = vunpack.c.l.b16 %v491
    %v511 = vunpack.c.h.b16 %v491
    %v512 = vunpack.c.l.b16 %v492
    %v513 = vunpack.c.h.b16 %v492
    %v514 = vunpack.c.l.b16 %v493
    %v515 = vunpack.c.h.b16 %v493
    %v516 = vunpack.c.l.b16 %v494
    %v517 = vunpack.c.h.b16 %v494
    %v518 = vunpack.c.l.b16 %v495
    %v519 = vunpack.c.h.b16 %v495
    %v520 = vpack.c.b16 %v504, %v504
    %v521 = vpack.c.b16 %v505, %v505
    %v522 = vpack.c.b16 %v506, %v506
    %v523 = vpack.c.b16 %v507, %v507
    %v524 = vpack.c.b16 %v508, %v508
    %v525 = vpack.c.b16 %v509, %v509
    %v526 = vpack.c.b16 %v510, %v510
    %v527 = vpack.c.b16 %v511, %v511
    %v528 = vpack.c.b16 %v512, %v512
    %v529 = vpack.c.b16 %v513, %v513
    %v530 = vpack.c.b16 %v514, %v514
    %v531 = vpack.c.b16 %v515, %v515
    %v532 = vpack.c.b16 %v516, %v516
    %v533 = vpack.c.b16 %v517, %v517
    %v534 = vpack.c.b16 %v518, %v518
    %v535 = vpack.c.b16 %v519, %v519
    %552 = vst [vmem:[%s4] sm:$0xf] %v520
    %553 = vst [vmem:[%s4 + $0x4] sm:$0xf] %v521
    %554 = vst [vmem:[%s4 + $0x8] sm:$0xf] %v522
    %555 = vst [vmem:[%s4 + $0xc] sm:$0xf] %v523
    %556 = vst [vmem:[%s4 + $0x10] sm:$0xf] %v524
    %557 = vst [vmem:[%s4 + $0x14] sm:$0xf] %v525
    %558 = vst [vmem:[%s4 + $0x18] sm:$0xf] %v526
    %559 = vst [vmem:[%s4 + $0x1c] sm:$0xf] %v527
    %560 = vst [vmem:[%s4 + $0x20] sm:$0xf] %v528
    %561 = vst [vmem:[%s4 + $0x24] sm:$0xf] %v529
    %562 = vst [vmem:[%s4 + $0x28] sm:$0xf] %v530
    %563 = vst [vmem:[%s4 + $0x2c] sm:$0xf] %v531
    %564 = vst [vmem:[%s4 + $0x30] sm:$0xf] %v532
    %565 = vst [vmem:[%s4 + $0x34] sm:$0xf] %v533
    %566 = vst [vmem:[%s4 + $0x38] sm:$0xf] %v534
    %567 = vst [vmem:[%s4 + $0x3c] sm:$0xf] %v535
  $region25: #{matmul_bn_act.1} parent=0 // pred_fallthru
    _
  // Predicated region
  $region26: #{matmul_bn_act.1} parent=0 // pred_check
    _
  $region27: #{matmul_bn_act.1} parent=0 // pred_check_branch
    %569 = sbr.rel (0) target = $region29
  $region28: #{matmul_bn_act.1} parent=0 // pred_region
    _
  $region29: #{matmul_bn_act.1} parent=0 // pred_fallthru
    _
  // Predicated region
  $region30: #{matmul_bn_act.1} parent=0 // pred_check
    _
  $region31: #{matmul_bn_act.1} parent=0 // pred_check_branch
    %571 = sbr.rel (0) target = $region33
  $region32: #{matmul_bn_act.1} parent=0 // pred_region
    _
  $region33: #{matmul_bn_act.1} parent=0 // pred_fallthru
    _

</llo_original>
